<compile_context>
chip_gen: v5e
topology: v5e:2x2
jax: 0.10.0
libtpu: 0.0.40
codegen_flags: <defaults>
</compile_context>

<pallas_src>
import functools
import math

import jax
import jax.numpy as jnp
from jax.experimental import pallas as pl
from jax.experimental.pallas import tpu as pltpu

D_MODEL = 32
MAX_LEN = 2048        # small synthetic max_len (module default is 5000)
P_DROP = 0.1
ROW_TILE = 512        # sequence-axis tile for the lane-dense slab


def make_positional_table(max_len: int, d_model: int) -> jnp.ndarray:
    """Deterministic sin/cos table, same math as the PyTorch __init__."""
    position = jnp.arange(max_len, dtype=jnp.float32)[:, None]            # (L, 1)
    div_term = jnp.exp(
        jnp.arange(0, d_model, 2, dtype=jnp.float32) * (-math.log(10000.0) / d_model)
    )                                                                     # (D/2,)
    pe = jnp.zeros((max_len, 1, d_model), dtype=jnp.float32)
    pe = pe.at[:, 0, 0::2].set(jnp.sin(position * div_term))
    pe = pe.at[:, 0, 1::2].set(jnp.cos(position * div_term))
    return pe


def _pos_enc_dropout_kernel(x_ref, pe_ref, bits_ref, o_ref, *, threshold, scale):
    """One (tile_s, B*D) slab: y = x + pe, then inverted dropout."""
    y = x_ref[...].astype(jnp.float32) + pe_ref[...]
    keep = bits_ref[...] >= jnp.uint32(threshold)           # P(keep) = 1 - p
    o_ref[...] = jnp.where(keep, y * jnp.float32(scale),
                           jnp.float32(0.0)).astype(o_ref.dtype)


def positional_encoding(x, pe, *, key=None, p: float = P_DROP,
                        training: bool = True, row_tile: int = ROW_TILE):
    """x: (seq_len, batch, d_model); pe: (max_len, 1, d_model)."""
    S, B, D = x.shape
    pe_rows = pe[:S, 0, :].astype(jnp.float32)               # (S, D)

    if (not training) or p <= 0.0:
        # Dropout is identity: let XLA fuse the broadcast add (no kernel launch,
        # no extra HBM round trip).
        return (x + pe_rows[:, None, :]).astype(x.dtype)

    if key is None:
        key = jax.random.PRNGKey(0)

    BD = B * D
    x2 = x.reshape(S, BD)                                     # lane-dense slab
    pe2 = jnp.broadcast_to(pe_rows[:, None, :], (S, B, D)).reshape(S, BD)
    bits = jax.random.bits(key, (S, BD), dtype=jnp.uint32)

    tile = S if S <= row_tile else row_tile                   # multiple of 8 or full
    grid = (pl.cdiv(S, tile),)

    threshold = min(int(round(p * 2.0 ** 32)), 2 ** 32 - 1)
    scale = 1.0 / (1.0 - p)
    kernel = functools.partial(_pos_enc_dropout_kernel,
                               threshold=threshold, scale=scale)

    itemsize = jnp.dtype(x.dtype).itemsize
    cost = pl.CostEstimate(
        flops=2 * S * BD,
        transcendentals=0,
        bytes_accessed=S * BD * (2 * itemsize + 4 + 4),       # x + out + pe + bits
    )

    slab_spec = pl.BlockSpec((tile, BD), lambda i: (i, 0))
    out = pl.pallas_call(
        kernel,
        out_shape=jax.ShapeDtypeStruct((S, BD), x.dtype),
        grid=grid,
        in_specs=[slab_spec, slab_spec, slab_spec],
        out_specs=slab_spec,
        compiler_params=pltpu.CompilerParams(
            dimension_semantics=("parallel",)),
        cost_estimate=cost,
    )(x2, pe2, bits)
    return out.reshape(S, B, D)


if __name__ == "__main__":
    key = jax.random.PRNGKey(0)
    kx, kd1, kd2 = jax.random.split(key, 3)

    pe = make_positional_table(MAX_LEN, D_MODEL)

    # --- small shape with the module's (seq_len, batch, d_model) convention ---
    S, B, D = 8, 2, D_MODEL
    x = jax.random.normal(kx, (S, B, D), dtype=jnp.float32)
    ref = x + pe[:S]

    # Eval mode: dropout is identity (pure XLA path, no kernel).
    out_eval = jax.block_until_ready(positional_encoding(x, pe, training=False))
    assert out_eval.shape == (S, B, D)
    assert jnp.allclose(out_eval, ref, atol=1e-5, rtol=1e-5), "eval mismatch"

    # Train mode: exercises the Pallas kernel (single-tile grid).
    out_train = jax.block_until_ready(
        positional_encoding(x, pe, key=kd1, training=True))
    assert out_train.shape == (S, B, D)
    scaled = ref / (1.0 - P_DROP)
    close = jnp.isclose(out_train, scaled, atol=1e-5, rtol=1e-5)
    zeroed = out_train == 0.0
    assert bool(jnp.all(close | zeroed)), "dropout semantics mismatch"
    assert bool(jnp.any(close)), "everything dropped"

    # Larger sequence: exercises multi-block tiling along S (grid of 2 tiles).
    S2 = 1024
    x_big = jax.random.normal(kx, (S2, B, D), dtype=jnp.float32)
    ref_big = x_big + pe[:S2]
    out_big = jax.block_until_ready(
        positional_encoding(x_big, pe, key=kd2, training=True))
    assert out_big.shape == (S2, B, D)
    scaled_big = ref_big / (1.0 - P_DROP)
    close_big = jnp.isclose(out_big, scaled_big, atol=1e-5, rtol=1e-5)
    zeroed_big = out_big == 0.0
    assert bool(jnp.all(close_big | zeroed_big)), "dropout semantics mismatch (tiled)"
    drop_frac = float(jnp.mean(zeroed_big))
    assert 0.05 < drop_frac < 0.2, f"drop fraction {drop_frac} far from p={P_DROP}"

    print("KERNEL_OK")
</pallas_src>

<mosaic_0001>
module attributes {stable_mosaic.version = 11 : i64} {
  func.func @_pos_enc_dropout_kernel(%arg0: i32, %arg1: memref<8x64xf32, #tpu.memory_space<vmem>>, %arg2: memref<8x64xf32, #tpu.memory_space<vmem>>, %arg3: memref<8x64xi32, #tpu.memory_space<vmem>>, %arg4: memref<8x64xf32, #tpu.memory_space<vmem>>) attributes {dimension_semantics = [#tpu.dimension_semantics<parallel>], iteration_bounds = array<i64: 1>, scalar_prefetch = 0 : i64, scratch_operands = 0 : i64, tpu.core_type = #tpu.core_type<tc>, window_params = [{transform_indices = @transform_0, window_bounds = array<i64: 8, 64>}, {transform_indices = @transform_1, window_bounds = array<i64: 8, 64>}, {transform_indices = @transform_2, window_bounds = array<i64: 8, 64>}, {transform_indices = @transform_3, window_bounds = array<i64: 8, 64>}]} {
    %c0 = arith.constant 0 : index
    %c0_0 = arith.constant 0 : index
    %0 = vector.load %arg1[%c0, %c0_0] : memref<8x64xf32, #tpu.memory_space<vmem>>, vector<8x64xf32>
    %c0_1 = arith.constant 0 : index
    %c0_2 = arith.constant 0 : index
    %1 = vector.load %arg2[%c0_1, %c0_2] : memref<8x64xf32, #tpu.memory_space<vmem>>, vector<8x64xf32>
    %2 = arith.addf %0, %1 : vector<8x64xf32>
    %c0_3 = arith.constant 0 : index
    %c0_4 = arith.constant 0 : index
    %3 = vector.load %arg3[%c0_3, %c0_4] : memref<8x64xi32, #tpu.memory_space<vmem>>, vector<8x64xi32>
    %c429496730_i32 = arith.constant 429496730 : i32
    %4 = vector.broadcast %c429496730_i32 : i32 to vector<8x64xi32>
    %5 = arith.cmpi uge, %3, %4 : vector<8x64xi32>
    %cst = arith.constant 1.11111116 : f32
    %6 = vector.broadcast %cst : f32 to vector<8x64xf32>
    %7 = arith.mulf %2, %6 : vector<8x64xf32>
    %cst_5 = arith.constant 0.000000e+00 : f32
    %8 = vector.broadcast %cst_5 : f32 to vector<8x64xf32>
    %9 = arith.select %5, %7, %8 : vector<8x64xi1>, vector<8x64xf32>
    %c0_6 = arith.constant 0 : index
    %c0_7 = arith.constant 0 : index
    %10 = vector.load %arg4[%c0_6, %c0_7] : memref<8x64xf32, #tpu.memory_space<vmem>>, vector<8x64xf32>
    tpu.vector_store %arg4[%c0_6, %c0_7], %9 {strides = array<i32>} : memref<8x64xf32, #tpu.memory_space<vmem>>, vector<8x64xf32>,
    return
  }
  func.func @transform_0(%arg0: i32) -> (i32, i32) {
    %c0_i32 = arith.constant 0 : i32
    %c0_i32_0 = arith.constant 0 : i32
    return %arg0, %c0_i32 : i32, i32
  }
  func.func @transform_1(%arg0: i32) -> (i32, i32) {
    %c0_i32 = arith.constant 0 : i32
    %c0_i32_0 = arith.constant 0 : i32
    return %arg0, %c0_i32 : i32, i32
  }
  func.func @transform_2(%arg0: i32) -> (i32, i32) {
    %c0_i32 = arith.constant 0 : i32
    %c0_i32_0 = arith.constant 0 : i32
    return %arg0, %c0_i32 : i32, i32
  }
  func.func @transform_3(%arg0: i32) -> (i32, i32) {
    %c0_i32 = arith.constant 0 : i32
    %c0_i32_0 = arith.constant 0 : i32
    return %arg0, %c0_i32 : i32, i32
  }
}

</mosaic_0001>

<llo_original>
// kernel: tpu_custom_call.1
$region0: #{tpu_custom_call.1}
  #allocation0 [shape = 'u32[]', space=smem, size = 0x4, offset = 0x4, fixed_abs, tag = 'smem constant byte address 0x4 - core index']
  #allocation1 [shape = 'u32[72,128]{1,0:T(1,128)}', space=vmem, size = 0x9000, scoped, tag = 'internal scratch']
  %s0 = inlined_call_operand.hbm [shape: f32[8,64], index: 0, kind: input, shape index: {}]
  %s1 = inlined_call_operand.hbm [shape: f32[8,64], index: 1, kind: input, shape index: {}]
  %s2 = inlined_call_operand.hbm [shape: u32[8,64], index: 2, kind: input, shape index: {}]
  %s3 = inlined_call_operand.hbm [shape: f32[8,64], index: 3, kind: output, shape index: {}]
  %s4 = sld [smem:[#allocation0]]
  $region34: #{tpu_custom_call.1} parent=0
    _
  %s6 = ssub.s32 1, %s4
  %s7 = scalar_select 0, %s6, %s4
  $region1: #{tpu_custom_call.1} parent=0
    #allocation2 [shape = 'u8[4096]{0}', space=vmem, size = 0x1000, scoped, tag = 'input window, operand 0, single buffered']
    #allocation3 [shape = 's32[1]{0}', space=sflag, size = 0x4, scoped, tag = 'scoped memory for tpu_custom_call.1']
    #allocation4 [shape = 's32[1]{0}', space=sflag, size = 0x4, scoped, tag = 'scoped memory for tpu_custom_call.1']
    #allocation5 [shape = 'u8[4096]{0}', space=vmem, size = 0x1000, scoped, tag = 'input window, operand 1, single buffered']
    #allocation6 [shape = 's32[1]{0}', space=sflag, size = 0x4, scoped, tag = 'scoped memory for tpu_custom_call.1']
    #allocation7 [shape = 'u8[4096]{0}', space=vmem, size = 0x1000, scoped, tag = 'input window, operand 2, single buffered']
    #allocation8 [shape = 'u8[4096]{0}', space=vmem, size = 0x1000, scoped, tag = 'output window, operand 0, single buffered']
    %8 = vsyncpa [#allocation3], 0
    %9 = vsyncpa [#allocation6], 0
    %10 = vsyncpa [#allocation4], 0
    // Predicated region
    $region2: #{tpu_custom_call.1} parent=1 // pred_check
      _
    $region3: #{tpu_custom_call.1} parent=1 // pred_check_branch
      %12 = sbr.rel (0) target = $region5
    $region4: #{tpu_custom_call.1} parent=1 // pred_region
      %14 = vsyncadd [#allocation3], 0
      %s16 = sshll.u32 %s0, 4
      %s17 = int_to_ptr.hbm [resolvable:$true] %s16
      %s18 = sshll.u32 [#allocation2], 4
      %s19 = int_to_ptr.vmem [resolvable:$true] %s18
      %21 = dma.hbm_to_vmem [thread:$0]  %s17, 128, %s19, [#allocation3]
    $region5: #{tpu_custom_call.1} parent=1 // pred_fallthru
      _
    // Predicated region
    $region6: #{tpu_custom_call.1} parent=1 // pred_check
      _
    $region7: #{tpu_custom_call.1} parent=1 // pred_check_branch
      %23 = sbr.rel (0) target = $region9
    $region8: #{tpu_custom_call.1} parent=1 // pred_region
      %25 = vsyncadd [#allocation6], 0
      %s27 = sshll.u32 %s1, 4
      %s28 = int_to_ptr.hbm [resolvable:$true] %s27
      %s29 = sshll.u32 [#allocation5], 4
      %s30 = int_to_ptr.vmem [resolvable:$true] %s29
      %32 = dma.hbm_to_vmem [thread:$0]  %s28, 128, %s30, [#allocation6]
    $region9: #{tpu_custom_call.1} parent=1 // pred_fallthru
      _
    // Predicated region
    $region10: #{tpu_custom_call.1} parent=1 // pred_check
      _
    $region11: #{tpu_custom_call.1} parent=1 // pred_check_branch
      %34 = sbr.rel (0) target = $region13
    $region12: #{tpu_custom_call.1} parent=1 // pred_region
      %36 = vsyncadd [#allocation6], 0
      %s38 = sshll.u32 %s2, 4
      %s39 = int_to_ptr.hbm [resolvable:$true] %s38
      %s40 = sshll.u32 [#allocation7], 4
      %s41 = int_to_ptr.vmem [resolvable:$true] %s40
      %43 = dma.hbm_to_vmem [thread:$0]  %s39, 128, %s41, [#allocation6]
    $region13: #{tpu_custom_call.1} parent=1 // pred_fallthru
      _
    // Predicated region
    $region14: #{tpu_custom_call.1} parent=1 // pred_check
      _
    $region15: #{tpu_custom_call.1} parent=1 // pred_check_branch
      %45 = sbr.rel (0) target = $region17
    $region16: #{tpu_custom_call.1} parent=1 // pred_region
      %47 = dma.done [#allocation3], 128
    $region17: #{tpu_custom_call.1} parent=1 // pred_fallthru
      _
    // Predicated region
    $region18: #{tpu_custom_call.1} parent=1 // pred_check
      _
    $region19: #{tpu_custom_call.1} parent=1 // pred_check_branch
      %49 = sbr.rel (0) target = $region21
    $region20: #{tpu_custom_call.1} parent=1 // pred_region
      %51 = dma.done [#allocation6], 128
    $region21: #{tpu_custom_call.1} parent=1 // pred_fallthru
      _
    // Predicated region
    $region22: #{tpu_custom_call.1} parent=1 // pred_check
      _
    $region23: #{tpu_custom_call.1} parent=1 // pred_check_branch
      %53 = sbr.rel (0) target = $region25
    $region24: #{tpu_custom_call.1} parent=1 // pred_region
      %55 = dma.done [#allocation6], 128
    $region25: #{tpu_custom_call.1} parent=1 // pred_fallthru
      _
    %v56 = vld [vmem:[#allocation2] sm:$0xff]
    %v57 = vld [vmem:[#allocation5] sm:$0xff]
    %v58 = vadd.f32 %v56, %v57
    %v59 = vld [vmem:[#allocation7] sm:$0xff]
    %v60 = vadd.s32 %v59, 2147483648
    %vm62 = vcmp.ge.s32.totalorder %v60, 2576980378
    %v63 = vmul.f32 %v58, 1.1111112
    %v64 = vsel %vm62, %v63, 0.0
    %vm65 = vcmask 523264
    %66 = vst.msk [vmem:[#allocation8] sm:$0xff] %vm65, %v64
    // Predicated region
    $region26: #{tpu_custom_call.1} parent=1 // pred_check
      _
    $region27: #{tpu_custom_call.1} parent=1 // pred_check_branch
      %68 = sbr.rel (0) target = $region29
    $region28: #{tpu_custom_call.1} parent=1 // pred_region
      %70 = vsyncadd [#allocation4], 0
      %s72 = sshll.u32 [#allocation8], 4
      %s73 = int_to_ptr.vmem [resolvable:$true] %s72
      %s74 = sshll.u32 %s3, 4
      %s75 = int_to_ptr.hbm [resolvable:$true] %s74
      %77 = dma.vmem_to_hbm [thread:$0]  %s73, 128, %s75, [#allocation4]
    $region29: #{tpu_custom_call.1} parent=1 // pred_fallthru
      _
    // Predicated region
    $region30: #{tpu_custom_call.1} parent=1 // pred_check
      _
    $region31: #{tpu_custom_call.1} parent=1 // pred_check_branch
      %79 = sbr.rel (0) target = $region33
    $region32: #{tpu_custom_call.1} parent=1 // pred_region
      %81 = dma.done [#allocation4], 128
    $region33: #{tpu_custom_call.1} parent=1 // pred_fallthru
      _
    %82 = vsyncpa [#allocation3], 1
    %83 = vsyncpa [#allocation6], 1
    %84 = vsyncpa [#allocation4], 1

</llo_original>
